<compile_context>
chip_gen: v7x
topology: tpu7x:2x2x1
jax: 0.10.0
libtpu: 0.0.40
codegen_flags: <defaults>
</compile_context>

<pallas_src>
import jax
import jax.numpy as jnp
from jax.experimental import pallas as pl
from jax.experimental.pallas import tpu as pltpu

LANE = 128    # f32 lane width
SUBLANE = 8   # f32 sublane width


def _round_up(n, m):
    return ((n + m - 1) // m) * m


def _pad2d(a, rows, cols):
    r, c = a.shape
    if r == rows and c == cols:
        return a
    return jnp.pad(a, ((0, rows - r), (0, cols - c)))


def _sigmoid(x):
    # sigmoid(x) == 0.5 * tanh(0.5 * x) + 0.5 : single EUP tanh, no VALU divide.
    return 0.5 * jnp.tanh(0.5 * x) + 0.5


def mlp_kernel(x_ref, w1_ref, b1_ref, w2_ref, b2_ref, w3_ref, b3_ref, o_ref):
    # fc1 + sigmoid.  K = window_size (tiny) -> f32 here costs ~nothing; the
    # bias adds / sigmoids ride the VPU/EUP slots under the MXU work.
    h1 = jnp.dot(x_ref[...], w1_ref[...], preferred_element_type=jnp.float32)
    h1 = _sigmoid(h1 + b1_ref[...])

    # fc2 + sigmoid (bf16 MXU pass, f32 accumulation).
    h2 = jnp.dot(h1.astype(jnp.bfloat16), w2_ref[...],
                 preferred_element_type=jnp.float32)
    h2 = _sigmoid(h2 + b2_ref[...])

    # output layer (no activation), bf16 MXU pass.
    out = jnp.dot(h2.astype(jnp.bfloat16), w3_ref[...],
                  preferred_element_type=jnp.float32) + b3_ref[...]
    o_ref[...] = out.astype(o_ref.dtype)


def _vmem_capacity_bytes():
    try:
        return int(pltpu.get_tpu_info().vmem_capacity_bytes)
    except Exception:
        return 64 << 20   # conservative fallback (v7x per-core VMEM)


def mlp_forward(x, params, *, max_block_b=512):
    """x: [B, window_size] f32. params: weights stored [in, out] + (1, out) biases."""
    w1, b1 = params["w1"], params["b1"]
    w2, b2 = params["w2"], params["b2"]
    w3, b3 = params["w3"], params["b3"]

    B, W = x.shape
    H = w1.shape[1]
    V = w3.shape[1]

    # Lane-align the *output* dims of each layer only; the fc1 contraction dim
    # W stays at its real width (MXU pads K internally, and the block's last
    # dim equalling the full array dim keeps the BlockSpec legal).
    Hp = _round_up(H, LANE)
    Vp = _round_up(V, LANE)

    # Resident parameter footprint: w1 + biases in f32, w2/w3 in bf16.
    # Factor 2: the pipeline may double-buffer even constant-index blocks.
    weight_bytes = 4 * (W * Hp + 2 * Hp + Vp) + 2 * (Hp * Hp + Hp * Vp)
    resident_bytes = 2 * weight_bytes
    # TODO(synk): if resident_bytes alone exceeds vmem_cap (very large
    # hidden_sz), tile H/V with an extra "arbitrary" grid axis + VMEM
    # accumulator instead of relying on full weight residency.

    vmem_cap = int(0.75 * _vmem_capacity_bytes())   # ~96 MiB v5e/v6e, ~48 MiB v7x

    def tile_bytes(tb_):
        io = 2 * tb_ * 4 * (W + Vp)     # double-buffered x / out tiles (f32)
        act = 3 * tb_ * Hp * 4          # h1/h2 intermediates (+ bf16 copies)
        return io + act

    # Batch tile: as large as fits, floored at 256 rows (MXU M width on
    # v6e/v7x) unless the batch itself is smaller.
    tb = max(SUBLANE, min(max_block_b, _round_up(B, SUBLANE)))
    tb_floor = min(256, tb)
    while tb > tb_floor and resident_bytes + tile_bytes(tb) > vmem_cap:
        tb = max(tb_floor, tb // 2)
    # Guarantee >= 2 grid steps when the batch permits so the "parallel" axis
    # can shard across v7x's two TensorCores.
    while _round_up(B, tb) // tb < 2 and tb >= 512:
        tb //= 2
    tb = _round_up(tb, SUBLANE)
    Bp = _round_up(B, tb)

    # Pad (exact, see header) and cast parameters once.
    xp = _pad2d(x, Bp, W).astype(jnp.float32)
    w1p = _pad2d(w1, W, Hp).astype(jnp.float32)
    b1p = _pad2d(b1, 1, Hp).astype(jnp.float32)
    w2p = _pad2d(w2, Hp, Hp).astype(jnp.bfloat16)
    b2p = _pad2d(b2, 1, Hp).astype(jnp.float32)
    w3p = _pad2d(w3, Hp, Vp).astype(jnp.bfloat16)
    b3p = _pad2d(b3, 1, Vp).astype(jnp.float32)

    grid = (Bp // tb,)

    cost = pl.CostEstimate(
        flops=2 * Bp * (W * Hp + Hp * Hp + Hp * Vp),
        transcendentals=2 * Bp * Hp,
        bytes_accessed=(4 * (Bp * W + W * Hp + Bp * Vp + 2 * Hp + Vp)
                        + 2 * (Hp * Hp + Hp * Vp)),
    )

    out_p = pl.pallas_call(
        mlp_kernel,
        out_shape=jax.ShapeDtypeStruct((Bp, Vp), jnp.float32),
        grid_spec=pltpu.PrefetchScalarGridSpec(
            num_scalar_prefetch=0,
            grid=grid,
            in_specs=[
                pl.BlockSpec((tb, W), lambda i: (i, 0)),    # x: streamed, real width
                pl.BlockSpec((W, Hp), lambda i: (0, 0)),    # w1 (f32, tiny, resident)
                pl.BlockSpec((1, Hp), lambda i: (0, 0)),    # b1
                pl.BlockSpec((Hp, Hp), lambda i: (0, 0)),   # w2 (bf16, resident)
                pl.BlockSpec((1, Hp), lambda i: (0, 0)),    # b2
                pl.BlockSpec((Hp, Vp), lambda i: (0, 0)),   # w3 (bf16, resident)
                pl.BlockSpec((1, Vp), lambda i: (0, 0)),    # b3
            ],
            out_specs=pl.BlockSpec((tb, Vp), lambda i: (i, 0)),  # lane-dense output
        ),
        compiler_params=pltpu.CompilerParams(
            dimension_semantics=("parallel",),   # batch tiles shard across TCs
            vmem_limit_bytes=vmem_cap,
        ),
        cost_estimate=cost,
    )(xp, w1p, b1p, w2p, b2p, w3p, b3p)

    # Slice away batch / vocab padding.
    return out_p[:B, :V]


def init_params(key, window_size, hidden_sz, vocab_sz):
    """nn.Linear-style uniform(-1/sqrt(in), 1/sqrt(in)) init; weights stored [in, out]."""
    ks = jax.random.split(key, 6)

    def lin(kw, kb, fan_in, fan_out):
        bound = 1.0 / jnp.sqrt(fan_in)
        w = jax.random.uniform(kw, (fan_in, fan_out), jnp.float32, -bound, bound)
        b = jax.random.uniform(kb, (1, fan_out), jnp.float32, -bound, bound)
        return w, b

    w1, b1 = lin(ks[0], ks[1], window_size, hidden_sz)
    w2, b2 = lin(ks[2], ks[3], hidden_sz, hidden_sz)
    w3, b3 = lin(ks[4], ks[5], hidden_sz, vocab_sz)
    return {"w1": w1, "b1": b1, "w2": w2, "b2": b2, "w3": w3, "b3": b3}


if __name__ == "__main__":
    window_size = 4
    hidden_sz = 32
    vocab_sz = 16
    batch = 8

    key = jax.random.PRNGKey(0)
    k_x, k_p = jax.random.split(key)
    x = jax.random.normal(k_x, (batch, window_size), jnp.float32)
    params = init_params(k_p, window_size, hidden_sz, vocab_sz)

    out = mlp_forward(x, params)
    jax.block_until_ready(out)

    # Pure-JAX f32 reference of the same math (unpadded).
    h1 = jax.nn.sigmoid(x @ params["w1"] + params["b1"])
    h2 = jax.nn.sigmoid(h1 @ params["w2"] + params["b2"])
    ref = h2 @ params["w3"] + params["b3"]

    assert out.shape == (batch, vocab_sz)
    # fc2/fc3 run in bf16 on the MXU -> loosened tolerance vs the f32 reference.
    assert jnp.allclose(out, ref, atol=2e-2, rtol=2e-2)

    print("KERNEL_OK")
</pallas_src>

<mosaic_0001>
module attributes {stable_mosaic.version = 11 : i64} {
  func.func @mlp_kernel(%arg0: i32, %arg1: memref<8x4xf32, #tpu.memory_space<vmem>>, %arg2: memref<4x128xf32, #tpu.memory_space<vmem>>, %arg3: memref<1x128xf32, #tpu.memory_space<vmem>>, %arg4: memref<128x128xbf16, #tpu.memory_space<vmem>>, %arg5: memref<1x128xf32, #tpu.memory_space<vmem>>, %arg6: memref<128x128xbf16, #tpu.memory_space<vmem>>, %arg7: memref<1x128xf32, #tpu.memory_space<vmem>>, %arg8: memref<8x128xf32, #tpu.memory_space<vmem>>) attributes {dimension_semantics = [#tpu.dimension_semantics<parallel>], iteration_bounds = array<i64: 1>, scalar_prefetch = 0 : i64, scratch_operands = 0 : i64, tpu.core_type = #tpu.core_type<tc>, window_params = [{transform_indices = @transform_0, window_bounds = array<i64: 8, 4>}, {pipeline_mode = #tpu.pipeline_mode<synchronous>, transform_indices = @transform_1, window_bounds = array<i64: 4, 128>}, {pipeline_mode = #tpu.pipeline_mode<synchronous>, transform_indices = @transform_2, window_bounds = array<i64: 1, 128>}, {pipeline_mode = #tpu.pipeline_mode<synchronous>, transform_indices = @transform_3, window_bounds = array<i64: 128, 128>}, {pipeline_mode = #tpu.pipeline_mode<synchronous>, transform_indices = @transform_4, window_bounds = array<i64: 1, 128>}, {pipeline_mode = #tpu.pipeline_mode<synchronous>, transform_indices = @transform_5, window_bounds = array<i64: 128, 128>}, {pipeline_mode = #tpu.pipeline_mode<synchronous>, transform_indices = @transform_6, window_bounds = array<i64: 1, 128>}, {transform_indices = @transform_7, window_bounds = array<i64: 8, 128>}]} {
    %c0 = arith.constant 0 : index
    %c0_0 = arith.constant 0 : index
    %0 = vector.load %arg1[%c0, %c0_0] : memref<8x4xf32, #tpu.memory_space<vmem>>, vector<8x4xf32>
    %c0_1 = arith.constant 0 : index
    %c0_2 = arith.constant 0 : index
    %1 = vector.load %arg2[%c0_1, %c0_2] : memref<4x128xf32, #tpu.memory_space<vmem>>, vector<4x128xf32>
    %cst = arith.constant dense<0.000000e+00> : vector<8x128xf32>
    %2 = tpu.matmul %0, %1, %cst {dimension_numbers = #tpu.dot_dimension_numbers<[1], [0], [0], [1], [0, 0, 1, 1], [], []>} : vector<8x4xf32>, vector<4x128xf32>, vector<8x128xf32> -> vector<8x128xf32>
    %c0_3 = arith.constant 0 : index
    %c0_4 = arith.constant 0 : index
    %3 = vector.load %arg3[%c0_3, %c0_4] : memref<1x128xf32, #tpu.memory_space<vmem>>, vector<1x128xf32>
    %4 = vector.broadcast %3 : vector<1x128xf32> to vector<8x128xf32>
    %5 = arith.addf %2, %4 : vector<8x128xf32>
    %cst_5 = arith.constant 5.000000e-01 : f32
    %6 = vector.broadcast %cst_5 : f32 to vector<8x128xf32>
    %7 = arith.mulf %6, %5 : vector<8x128xf32>
    %8 = math.tanh %7 : vector<8x128xf32>
    %cst_6 = arith.constant 5.000000e-01 : f32
    %9 = vector.broadcast %cst_6 : f32 to vector<8x128xf32>
    %10 = arith.mulf %9, %8 : vector<8x128xf32>
    %cst_7 = arith.constant 5.000000e-01 : f32
    %11 = vector.broadcast %cst_7 : f32 to vector<8x128xf32>
    %12 = arith.addf %10, %11 : vector<8x128xf32>
    %13 = arith.truncf %12 : vector<8x128xf32> to vector<8x128xbf16>
    %c0_8 = arith.constant 0 : index
    %c0_9 = arith.constant 0 : index
    %14 = vector.load %arg4[%c0_8, %c0_9] : memref<128x128xbf16, #tpu.memory_space<vmem>>, vector<128x128xbf16>
    %cst_10 = arith.constant dense<0.000000e+00> : vector<8x128xf32>
    %15 = tpu.matmul %13, %14, %cst_10 {dimension_numbers = #tpu.dot_dimension_numbers<[1], [0], [0], [1], [0, 0, 1, 1], [], []>} : vector<8x128xbf16>, vector<128x128xbf16>, vector<8x128xf32> -> vector<8x128xf32>
    %c0_11 = arith.constant 0 : index
    %c0_12 = arith.constant 0 : index
    %16 = vector.load %arg5[%c0_11, %c0_12] : memref<1x128xf32, #tpu.memory_space<vmem>>, vector<1x128xf32>
    %17 = vector.broadcast %16 : vector<1x128xf32> to vector<8x128xf32>
    %18 = arith.addf %15, %17 : vector<8x128xf32>
    %cst_13 = arith.constant 5.000000e-01 : f32
    %19 = vector.broadcast %cst_13 : f32 to vector<8x128xf32>
    %20 = arith.mulf %19, %18 : vector<8x128xf32>
    %21 = math.tanh %20 : vector<8x128xf32>
    %cst_14 = arith.constant 5.000000e-01 : f32
    %22 = vector.broadcast %cst_14 : f32 to vector<8x128xf32>
    %23 = arith.mulf %22, %21 : vector<8x128xf32>
    %cst_15 = arith.constant 5.000000e-01 : f32
    %24 = vector.broadcast %cst_15 : f32 to vector<8x128xf32>
    %25 = arith.addf %23, %24 : vector<8x128xf32>
    %26 = arith.truncf %25 : vector<8x128xf32> to vector<8x128xbf16>
    %c0_16 = arith.constant 0 : index
    %c0_17 = arith.constant 0 : index
    %27 = vector.load %arg6[%c0_16, %c0_17] : memref<128x128xbf16, #tpu.memory_space<vmem>>, vector<128x128xbf16>
    %cst_18 = arith.constant dense<0.000000e+00> : vector<8x128xf32>
    %28 = tpu.matmul %26, %27, %cst_18 {dimension_numbers = #tpu.dot_dimension_numbers<[1], [0], [0], [1], [0, 0, 1, 1], [], []>} : vector<8x128xbf16>, vector<128x128xbf16>, vector<8x128xf32> -> vector<8x128xf32>
    %c0_19 = arith.constant 0 : index
    %c0_20 = arith.constant 0 : index
    %29 = vector.load %arg7[%c0_19, %c0_20] : memref<1x128xf32, #tpu.memory_space<vmem>>, vector<1x128xf32>
    %30 = vector.broadcast %29 : vector<1x128xf32> to vector<8x128xf32>
    %31 = arith.addf %28, %30 : vector<8x128xf32>
    %c0_21 = arith.constant 0 : index
    %c0_22 = arith.constant 0 : index
    %32 = vector.load %arg8[%c0_21, %c0_22] : memref<8x128xf32, #tpu.memory_space<vmem>>, vector<8x128xf32>
    tpu.vector_store %arg8[%c0_21, %c0_22], %31 {strides = array<i32>} : memref<8x128xf32, #tpu.memory_space<vmem>>, vector<8x128xf32>,
    return
  }
  func.func @transform_0(%arg0: i32) -> (i32, i32) {
    %c0_i32 = arith.constant 0 : i32
    %c0_i32_0 = arith.constant 0 : i32
    return %arg0, %c0_i32 : i32, i32
  }
  func.func @transform_1(%arg0: i32) -> (i32, i32) {
    %c0_i32 = arith.constant 0 : i32
    %c0_i32_0 = arith.constant 0 : i32
    %c0_i32_1 = arith.constant 0 : i32
    return %c0_i32, %c0_i32_0 : i32, i32
  }
  func.func @transform_2(%arg0: i32) -> (i32, i32) {
    %c0_i32 = arith.constant 0 : i32
    %c0_i32_0 = arith.constant 0 : i32
    %c0_i32_1 = arith.constant 0 : i32
    return %c0_i32, %c0_i32_0 : i32, i32
  }
  func.func @transform_3(%arg0: i32) -> (i32, i32) {
    %c0_i32 = arith.constant 0 : i32
    %c0_i32_0 = arith.constant 0 : i32
    %c0_i32_1 = arith.constant 0 : i32
    return %c0_i32, %c0_i32_0 : i32, i32
  }
  func.func @transform_4(%arg0: i32) -> (i32, i32) {
    %c0_i32 = arith.constant 0 : i32
    %c0_i32_0 = arith.constant 0 : i32
    %c0_i32_1 = arith.constant 0 : i32
    return %c0_i32, %c0_i32_0 : i32, i32
  }
  func.func @transform_5(%arg0: i32) -> (i32, i32) {
    %c0_i32 = arith.constant 0 : i32
    %c0_i32_0 = arith.constant 0 : i32
    %c0_i32_1 = arith.constant 0 : i32
    return %c0_i32, %c0_i32_0 : i32, i32
  }
  func.func @transform_6(%arg0: i32) -> (i32, i32) {
    %c0_i32 = arith.constant 0 : i32
    %c0_i32_0 = arith.constant 0 : i32
    %c0_i32_1 = arith.constant 0 : i32
    return %c0_i32, %c0_i32_0 : i32, i32
  }
  func.func @transform_7(%arg0: i32) -> (i32, i32) {
    %c0_i32 = arith.constant 0 : i32
    %c0_i32_0 = arith.constant 0 : i32
    return %arg0, %c0_i32 : i32, i32
  }
}

</mosaic_0001>

<llo_original>
// kernel: tpu_custom_call.1
$region0: #{tpu_custom_call.1}
  #allocation0 [shape = 'u32[]', space=smem, size = 0x4, offset = 0x4, fixed_abs, tag = 'smem constant byte address 0x4 - core index']
  #allocation1 [shape = 'u32[144,128]{1,0:T(1,128)}', space=vmem, size = 0x12000, scoped, tag = 'internal scratch']
  %s0 = inlined_call_operand.vmem [shape: f32[8,4], index: 0, kind: input, shape index: {}]
  %s1 = inlined_call_operand.vmem [shape: f32[4,128], index: 1, kind: input, shape index: {}]
  %s2 = inlined_call_operand.vmem [shape: f32[1,128], index: 2, kind: input, shape index: {}]
  %s3 = inlined_call_operand.hbm [shape: bf16[128,128], index: 3, kind: input, shape index: {}]
  %s4 = inlined_call_operand.vmem [shape: f32[1,128], index: 4, kind: input, shape index: {}]
  %s5 = inlined_call_operand.hbm [shape: bf16[128,128], index: 5, kind: input, shape index: {}]
  %s6 = inlined_call_operand.vmem [shape: f32[1,128], index: 6, kind: input, shape index: {}]
  %s7 = inlined_call_operand.hbm [shape: f32[8,128], index: 7, kind: output, shape index: {}]
  %s8 = sld [smem:[#allocation0]]
  $region46: #{tpu_custom_call.1} parent=0
    _
  %s10 = ssub.s32 1, %s8
  %s11 = scalar_select 0, %s10, %s8
  $region1: #{tpu_custom_call.1} parent=0
    #allocation2 [shape = 'u8[32768]{0}', space=vmem, size = 0x8000, scoped, tag = 'input window, operand 3, single buffered']
    #allocation3 [shape = 's32[1]{0}', space=sflag, size = 0x4, scoped, tag = 'scoped memory for tpu_custom_call.1']
    #allocation4 [shape = 's32[1]{0}', space=sflag, size = 0x4, scoped, tag = 'scoped memory for tpu_custom_call.1']
    #allocation5 [shape = 'u8[32768]{0}', space=vmem, size = 0x8000, scoped, tag = 'input window, operand 5, single buffered']
    #allocation6 [shape = 's32[1]{0}', space=sflag, size = 0x4, scoped, tag = 'scoped memory for tpu_custom_call.1']
    #allocation7 [shape = 'u8[4096]{0}', space=vmem, size = 0x1000, scoped, tag = 'output window, operand 0, single buffered']
    %12 = vsyncpa [#allocation3], 0
    %13 = vsyncpa [#allocation6], 0
    %14 = vsyncpa [#allocation4], 0
    // Predicated region
    $region2: #{tpu_custom_call.1} parent=1 // pred_check
      _
    $region3: #{tpu_custom_call.1} parent=1 // pred_check_branch
      %16 = sbr.rel (0) target = $region5
    $region4: #{tpu_custom_call.1} parent=1 // pred_region
      _
    $region5: #{tpu_custom_call.1} parent=1 // pred_fallthru
      _
    // Predicated region
    $region6: #{tpu_custom_call.1} parent=1 // pred_check
      _
    $region7: #{tpu_custom_call.1} parent=1 // pred_check_branch
      %18 = sbr.rel (0) target = $region9
    $region8: #{tpu_custom_call.1} parent=1 // pred_region
      _
    $region9: #{tpu_custom_call.1} parent=1 // pred_fallthru
      _
    // Predicated region
    $region10: #{tpu_custom_call.1} parent=1 // pred_check
      _
    $region11: #{tpu_custom_call.1} parent=1 // pred_check_branch
      %20 = sbr.rel (0) target = $region13
    $region12: #{tpu_custom_call.1} parent=1 // pred_region
      _
    $region13: #{tpu_custom_call.1} parent=1 // pred_fallthru
      _
    // Predicated region
    $region14: #{tpu_custom_call.1} parent=1 // pred_check
      _
    $region15: #{tpu_custom_call.1} parent=1 // pred_check_branch
      %22 = sbr.rel (0) target = $region17
    $region16: #{tpu_custom_call.1} parent=1 // pred_region
      %s24 = ssub.s32 1024, 1024
      %25 = vsyncadd [#allocation3], %s24
      %s26 = sshll.u32 [#allocation2], 4
      %s27 = int_to_ptr.vmem [resolvable:$true] %s26
      %32 = dma.hbm_to_vmem [thread:$0]  %s3, 1024, %s27, [#allocation3], 64, 64, 4
    $region17: #{tpu_custom_call.1} parent=1 // pred_fallthru
      _
    // Predicated region
    $region18: #{tpu_custom_call.1} parent=1 // pred_check
      _
    $region19: #{tpu_custom_call.1} parent=1 // pred_check_branch
      %34 = sbr.rel (0) target = $region21
    $region20: #{tpu_custom_call.1} parent=1 // pred_region
      _
    $region21: #{tpu_custom_call.1} parent=1 // pred_fallthru
      _
    // Predicated region
    $region22: #{tpu_custom_call.1} parent=1 // pred_check
      _
    $region23: #{tpu_custom_call.1} parent=1 // pred_check_branch
      %36 = sbr.rel (0) target = $region25
    $region24: #{tpu_custom_call.1} parent=1 // pred_region
      %s38 = ssub.s32 1024, 1024
      %39 = vsyncadd [#allocation6], %s38
      %s40 = sshll.u32 [#allocation5], 4
      %s41 = int_to_ptr.vmem [resolvable:$true] %s40
      %46 = dma.hbm_to_vmem [thread:$0]  %s5, 1024, %s41, [#allocation6], 64, 64, 4
    $region25: #{tpu_custom_call.1} parent=1 // pred_fallthru
      _
    // Predicated region
    $region26: #{tpu_custom_call.1} parent=1 // pred_check
      _
    $region27: #{tpu_custom_call.1} parent=1 // pred_check_branch
      %48 = sbr.rel (0) target = $region29
    $region28: #{tpu_custom_call.1} parent=1 // pred_region
      _
    $region29: #{tpu_custom_call.1} parent=1 // pred_fallthru
      _
    // Predicated region
    $region30: #{tpu_custom_call.1} parent=1 // pred_check
      _
    $region31: #{tpu_custom_call.1} parent=1 // pred_check_branch
      %50 = sbr.rel (0) target = $region33
    $region32: #{tpu_custom_call.1} parent=1 // pred_region
      %51 = dma.done [#allocation3], 1024
    $region33: #{tpu_custom_call.1} parent=1 // pred_fallthru
      _
    // Predicated region
    $region34: #{tpu_custom_call.1} parent=1 // pred_check
      _
    $region35: #{tpu_custom_call.1} parent=1 // pred_check_branch
      %53 = sbr.rel (0) target = $region37
    $region36: #{tpu_custom_call.1} parent=1 // pred_region
      %54 = dma.done [#allocation6], 1024
    $region37: #{tpu_custom_call.1} parent=1 // pred_fallthru
      _
    %v56 = vld [vmem:[%s0] sm:$0xff]
    %v57 = vld [vmem:[%s1] sm:$0xf]
    %v58 = vld [vmem:[%s2] sm:$0x1]
    %v60 = vlaneseq
    %v61 = vshrl.u32 %v60, 7
    %v62 = vsub.s32 0, %v61
    %v63 = vrot.slane %v58, %v62
    %vm65 = vcmask 31744
    %v67 = vsel %vm65, %v56, 0
    %vm69 = vcmask 1043456
    %v71 = vsel %vm69, %v57, 0
    %73 = vmatprep.subr.mxu0 0.0
    %74 = vmatpush1.msra.mxu0 %v71
    %75 = vmatprep.subr.mxu0 0.0
    %76 = vmatpush1.msra.mxu0 0.0
    %77 = vmatprep.subr.mxu0 0.0
    %78 = vmatpush1.msra.mxu0 0.0
    %79 = vmatprep.subr.mxu0 0.0
    %80 = vmatpush1.msra.mxu0 0.0
    %81 = vmatprep.subr.mxu0 0.0
    %82 = vmatpush1.msra.mxu0 0.0
    %83 = vmatprep.subr.mxu0 0.0
    %84 = vmatpush1.msra.mxu0 0.0
    %85 = vmatprep.subr.mxu0 0.0
    %86 = vmatpush1.msra.mxu0 0.0
    %87 = vmatprep.subr.mxu0 0.0
    %88 = vmatpush1.msra.mxu0 0.0
    %89 = vmatprep.subr.mxu0 0.0
    %90 = vmatpush1.msra.mxu0 0.0
    %91 = vmatprep.subr.mxu0 0.0
    %92 = vmatpush1.msra.mxu0 0.0
    %93 = vmatprep.subr.mxu0 0.0
    %94 = vmatpush1.msra.mxu0 0.0
    %95 = vmatprep.subr.mxu0 0.0
    %96 = vmatpush1.msra.mxu0 0.0
    %97 = vmatprep.subr.mxu0 0.0
    %98 = vmatpush1.msra.mxu0 0.0
    %99 = vmatprep.subr.mxu0 0.0
    %100 = vmatpush1.msra.mxu0 0.0
    %101 = vmatprep.subr.mxu0 0.0
    %102 = vmatpush1.msra.mxu0 0.0
    %103 = vmatprep.subr.mxu0 0.0
    %104 = vmatpush1.msra.mxu0 0.0
    %105 = vmatprep.subr.mxu0 0.0
    %106 = vmatpush1.msra.mxu0 0.0
    %107 = vmatprep.subr.mxu0 0.0
    %108 = vmatpush1.msra.mxu0 0.0
    %109 = vmatprep.subr.mxu0 0.0
    %110 = vmatpush1.msra.mxu0 0.0
    %111 = vmatprep.subr.mxu0 0.0
    %112 = vmatpush1.msra.mxu0 0.0
    %113 = vmatprep.subr.mxu0 0.0
    %114 = vmatpush1.msra.mxu0 0.0
    %115 = vmatprep.subr.mxu0 0.0
    %116 = vmatpush1.msra.mxu0 0.0
    %117 = vmatprep.subr.mxu0 0.0
    %118 = vmatpush1.msra.mxu0 0.0
    %119 = vmatprep.subr.mxu0 0.0
    %120 = vmatpush1.msra.mxu0 0.0
    %121 = vmatprep.subr.mxu0 0.0
    %122 = vmatpush1.msra.mxu0 0.0
    %123 = vmatprep.subr.mxu0 0.0
    %124 = vmatpush1.msra.mxu0 0.0
    %125 = vmatprep.subr.mxu0 0.0
    %126 = vmatpush1.msra.mxu0 0.0
    %127 = vmatprep.subr.mxu0 0.0
    %128 = vmatpush1.msra.mxu0 0.0
    %129 = vmatprep.subr.mxu0 0.0
    %130 = vmatpush1.msra.mxu0 0.0
    %131 = vmatprep.subr.mxu0 0.0
    %132 = vmatpush1.msra.mxu0 0.0
    %133 = vmatprep.subr.mxu0 0.0
    %134 = vmatpush1.msra.mxu0 0.0
    %135 = vmatprep.subr.mxu0 0.0
    %136 = vmatpush1.msra.mxu0 0.0
    %137 = vmatprep.mubr.f32.mxu0 0.0
    %138 = vmatmul.mubr.f32.gmra.mrb[0].mxu0 %v67
    %v139 = vpop.f32.mrb[0].mxu0
    %v140 = vadd.f32 %v63, %v139
    %v141 = vpop.f32.mrb[0].mxu0
    %142 = vdwg.mxu0
    %v143 = vmul.f32 %v140, 0.5
    %v144 = vtanh.pop %v143
    %v145 = vmul.f32 %v144, 0.5
    %v146 = vadd.f32 %v145, 0.5
    %v147 = vpack.c.bf16 %v146, %v146
    %v148 = vld [vmem:[#allocation2] sm:$0xf]
    %v149 = vld [vmem:[#allocation2 + $0x4] sm:$0xf]
    %v150 = vld [vmem:[#allocation2 + $0x8] sm:$0xf]
    %v151 = vld [vmem:[#allocation2 + $0xc] sm:$0xf]
    %v152 = vld [vmem:[#allocation2 + $0x10] sm:$0xf]
    %v153 = vld [vmem:[#allocation2 + $0x14] sm:$0xf]
    %v154 = vld [vmem:[#allocation2 + $0x18] sm:$0xf]
    %v155 = vld [vmem:[#allocation2 + $0x1c] sm:$0xf]
    %v156 = vld [vmem:[#allocation2 + $0x20] sm:$0xf]
    %v157 = vld [vmem:[#allocation2 + $0x24] sm:$0xf]
    %v158 = vld [vmem:[#allocation2 + $0x28] sm:$0xf]
    %v159 = vld [vmem:[#allocation2 + $0x2c] sm:$0xf]
    %v160 = vld [vmem:[#allocation2 + $0x30] sm:$0xf]
    %v161 = vld [vmem:[#allocation2 + $0x34] sm:$0xf]
    %v162 = vld [vmem:[#allocation2 + $0x38] sm:$0xf]
    %v163 = vld [vmem:[#allocation2 + $0x3c] sm:$0xf]
    %v164 = vld [vmem:[%s4] sm:$0x1]
    %v166 = vlaneseq
    %v167 = vshrl.u32 %v166, 7
    %v168 = vsub.s32 0, %v167
    %v169 = vrot.slane %v164, %v168
    %v187 = vunpack.c.l.b16 %v148
    %v188 = vunpack.c.l.b16 %v149
    %v189 = vunpack.c.l.b16 %v150
    %v190 = vunpack.c.l.b16 %v151
    %v191 = vunpack.c.l.b16 %v152
    %v192 = vunpack.c.l.b16 %v153
    %v193 = vunpack.c.l.b16 %v154
    %v194 = vunpack.c.l.b16 %v155
    %v195 = vunpack.c.l.b16 %v156
    %v196 = vunpack.c.l.b16 %v157
    %v197 = vunpack.c.l.b16 %v158
    %v198 = vunpack.c.l.b16 %v159
    %v199 = vunpack.c.l.b16 %v160
    %v200 = vunpack.c.l.b16 %v161
    %v201 = vunpack.c.l.b16 %v162
    %v202 = vunpack.c.l.b16 %v163
    %v203 = vpack.c.b16 %v188, %v187
    %v204 = vpack.c.b16 %v190, %v189
    %v205 = vpack.c.b16 %v192, %v191
    %v206 = vpack.c.b16 %v194, %v193
    %v207 = vpack.c.b16 %v196, %v195
    %v208 = vpack.c.b16 %v198, %v197
    %v209 = vpack.c.b16 %v200, %v199
    %v210 = vpack.c.b16 %v202, %v201
    %219 = vmatprep.subr.bf16.mxu0 0
    %220 = vmatpush1.bf16.msra.mxu0 %v203
    %221 = vmatprep.subr.bf16.mxu0 0
    %222 = vmatpush1.bf16.msra.mxu0 %v204
    %223 = vmatprep.subr.bf16.mxu0 0
    %224 = vmatpush1.bf16.msra.mxu0 %v205
    %225 = vmatprep.subr.bf16.mxu0 0
    %226 = vmatpush1.bf16.msra.mxu0 %v206
    %227 = vmatprep.subr.bf16.mxu0 0
    %228 = vmatpush1.bf16.msra.mxu0 %v207
    %229 = vmatprep.subr.bf16.mxu0 0
    %230 = vmatpush1.bf16.msra.mxu0 %v208
    %231 = vmatprep.subr.bf16.mxu0 0
    %232 = vmatpush1.bf16.msra.mxu0 %v209
    %233 = vmatprep.subr.bf16.mxu0 0
    %234 = vmatpush1.bf16.msra.mxu0 %v210
    %235 = vmatprep.subr.bf16.mxu0 0
    %236 = vmatpush1.bf16.msra.mxu0 0
    %237 = vmatprep.subr.bf16.mxu0 0
    %238 = vmatpush1.bf16.msra.mxu0 0
    %239 = vmatprep.subr.bf16.mxu0 0
    %240 = vmatpush1.bf16.msra.mxu0 0
    %241 = vmatprep.subr.bf16.mxu0 0
    %242 = vmatpush1.bf16.msra.mxu0 0
    %243 = vmatprep.subr.bf16.mxu0 0
    %244 = vmatpush1.bf16.msra.mxu0 0
    %245 = vmatprep.subr.bf16.mxu0 0
    %246 = vmatpush1.bf16.msra.mxu0 0
    %247 = vmatprep.subr.bf16.mxu0 0
    %248 = vmatpush1.bf16.msra.mxu0 0
    %249 = vmatprep.subr.bf16.mxu0 0
    %250 = vmatpush1.bf16.msra.mxu0 0
    %251 = vmatprep.mubr.bf16.mxu0 0
    %252 = vmatmul.mubr.bf16.gmra.mrb[0].mxu0 %v147
    %v253 = vpop.f32.mrb[0].mxu0
    %v254 = vadd.f32 %v169, %v253
    %v255 = vpop.f32.mrb[0].mxu0
    %v256 = vpop.f32.mrb[0].mxu0
    %v257 = vpop.f32.mrb[0].mxu0
    %258 = vdwg.mxu0
    %v259 = vmul.f32 %v254, 0.5
    %v260 = vtanh.pop %v259
    %v261 = vmul.f32 %v260, 0.5
    %v262 = vadd.f32 %v261, 0.5
    %v263 = vpack.c.bf16 %v262, %v262
    %v264 = vld [vmem:[#allocation5] sm:$0xf]
    %v265 = vld [vmem:[#allocation5 + $0x4] sm:$0xf]
    %v266 = vld [vmem:[#allocation5 + $0x8] sm:$0xf]
    %v267 = vld [vmem:[#allocation5 + $0xc] sm:$0xf]
    %v268 = vld [vmem:[#allocation5 + $0x10] sm:$0xf]
    %v269 = vld [vmem:[#allocation5 + $0x14] sm:$0xf]
    %v270 = vld [vmem:[#allocation5 + $0x18] sm:$0xf]
    %v271 = vld [vmem:[#allocation5 + $0x1c] sm:$0xf]
    %v272 = vld [vmem:[#allocation5 + $0x20] sm:$0xf]
    %v273 = vld [vmem:[#allocation5 + $0x24] sm:$0xf]
    %v274 = vld [vmem:[#allocation5 + $0x28] sm:$0xf]
    %v275 = vld [vmem:[#allocation5 + $0x2c] sm:$0xf]
    %v276 = vld [vmem:[#allocation5 + $0x30] sm:$0xf]
    %v277 = vld [vmem:[#allocation5 + $0x34] sm:$0xf]
    %v278 = vld [vmem:[#allocation5 + $0x38] sm:$0xf]
    %v279 = vld [vmem:[#allocation5 + $0x3c] sm:$0xf]
    %v280 = vld [vmem:[%s6] sm:$0x1]
    %v282 = vlaneseq
    %v283 = vshrl.u32 %v282, 7
    %v284 = vsub.s32 0, %v283
    %v285 = vrot.slane %v280, %v284
    %v303 = vunpack.c.l.b16 %v264
    %v304 = vunpack.c.l.b16 %v265
    %v305 = vunpack.c.l.b16 %v266
    %v306 = vunpack.c.l.b16 %v267
    %v307 = vunpack.c.l.b16 %v268
    %v308 = vunpack.c.l.b16 %v269
    %v309 = vunpack.c.l.b16 %v270
    %v310 = vunpack.c.l.b16 %v271
    %v311 = vunpack.c.l.b16 %v272
    %v312 = vunpack.c.l.b16 %v273
    %v313 = vunpack.c.l.b16 %v274
    %v314 = vunpack.c.l.b16 %v275
    %v315 = vunpack.c.l.b16 %v276
    %v316 = vunpack.c.l.b16 %v277
    %v317 = vunpack.c.l.b16 %v278
    %v318 = vunpack.c.l.b16 %v279
    %v319 = vpack.c.b16 %v304, %v303
    %v320 = vpack.c.b16 %v306, %v305
    %v321 = vpack.c.b16 %v308, %v307
    %v322 = vpack.c.b16 %v310, %v309
    %v323 = vpack.c.b16 %v312, %v311
    %v324 = vpack.c.b16 %v314, %v313
    %v325 = vpack.c.b16 %v316, %v315
    %v326 = vpack.c.b16 %v318, %v317
    %335 = vmatprep.subr.bf16.mxu0 0
    %336 = vmatpush1.bf16.msra.mxu0 %v319
    %337 = vmatprep.subr.bf16.mxu0 0
    %338 = vmatpush1.bf16.msra.mxu0 %v320
    %339 = vmatprep.subr.bf16.mxu0 0
    %340 = vmatpush1.bf16.msra.mxu0 %v321
    %341 = vmatprep.subr.bf16.mxu0 0
    %342 = vmatpush1.bf16.msra.mxu0 %v322
    %343 = vmatprep.subr.bf16.mxu0 0
    %344 = vmatpush1.bf16.msra.mxu0 %v323
    %345 = vmatprep.subr.bf16.mxu0 0
    %346 = vmatpush1.bf16.msra.mxu0 %v324
    %347 = vmatprep.subr.bf16.mxu0 0
    %348 = vmatpush1.bf16.msra.mxu0 %v325
    %349 = vmatprep.subr.bf16.mxu0 0
    %350 = vmatpush1.bf16.msra.mxu0 %v326
    %351 = vmatprep.subr.bf16.mxu0 0
    %352 = vmatpush1.bf16.msra.mxu0 0
    %353 = vmatprep.subr.bf16.mxu0 0
    %354 = vmatpush1.bf16.msra.mxu0 0
    %355 = vmatprep.subr.bf16.mxu0 0
    %356 = vmatpush1.bf16.msra.mxu0 0
    %357 = vmatprep.subr.bf16.mxu0 0
    %358 = vmatpush1.bf16.msra.mxu0 0
    %359 = vmatprep.subr.bf16.mxu0 0
    %360 = vmatpush1.bf16.msra.mxu0 0
    %361 = vmatprep.subr.bf16.mxu0 0
    %362 = vmatpush1.bf16.msra.mxu0 0
    %363 = vmatprep.subr.bf16.mxu0 0
    %364 = vmatpush1.bf16.msra.mxu0 0
    %365 = vmatprep.subr.bf16.mxu0 0
    %366 = vmatpush1.bf16.msra.mxu0 0
    %367 = vmatprep.mubr.bf16.mxu0 0
    %368 = vmatmul.mubr.bf16.gmra.mrb[0].mxu0 %v263
    %v369 = vpop.f32.mrb[0].mxu0
    %v370 = vadd.f32 %v285, %v369
    %v371 = vpop.f32.mrb[0].mxu0
    %v372 = vpop.f32.mrb[0].mxu0
    %v373 = vpop.f32.mrb[0].mxu0
    %374 = vdwg.mxu0
    %375 = vst [vmem:[#allocation7] sm:$0xff] %v370
    // Predicated region
    $region38: #{tpu_custom_call.1} parent=1 // pred_check
      _
    $region39: #{tpu_custom_call.1} parent=1 // pred_check_branch
      %377 = sbr.rel (0) target = $region41
    $region40: #{tpu_custom_call.1} parent=1 // pred_region
      %s379 = ssub.s32 128, 128
      %380 = vsyncadd [#allocation4], %s379
      %s382 = sshll.u32 [#allocation7], 4
      %s383 = int_to_ptr.vmem [resolvable:$true] %s382
      %385 = dma.vmem_to_hbm [thread:$0]  %s383, 128, %s7, [#allocation4]
    $region41: #{tpu_custom_call.1} parent=1 // pred_fallthru
      _
    // Predicated region
    $region42: #{tpu_custom_call.1} parent=1 // pred_check
      _
    $region43: #{tpu_custom_call.1} parent=1 // pred_check_branch
      %387 = sbr.rel (0) target = $region45
    $region44: #{tpu_custom_call.1} parent=1 // pred_region
      %388 = dma.done [#allocation4], 128
    $region45: #{tpu_custom_call.1} parent=1 // pred_fallthru
      _
    %389 = vsyncpa [#allocation3], 1
    %390 = vsyncpa [#allocation6], 1
    %391 = vsyncpa [#allocation4], 1

</llo_original>
